<compile_context>
chip_gen: v7x
topology: tpu7x:2x2x1
jax: 0.10.0
libtpu: 0.0.40
codegen_flags: <defaults>
</compile_context>

<pallas_src>
import jax
import jax.numpy as jnp
from jax.experimental import pallas as pl
from jax.experimental.pallas import tpu as pltpu

# Below this size the kernel-launch + DMA-descriptor overhead dominates the
# copy itself; the forward is identity, so we just return `x`.
_FAST_PATH_MAX_BYTES = 64 * 1024  # 64 KiB


# ----------------------------- Pallas kernel --------------------------------

def _checkbp_dma_kernel(x_hbm_ref, o_hbm_ref, copy_sem):
    # CheckBP forward: y = x. One whole-array HBM->HBM DMA (no VMEM staging,
    # no grid steps). Runs at the HBM roofline on all generations.
    cp = pltpu.make_async_copy(x_hbm_ref, o_hbm_ref, copy_sem)
    cp.start()
    cp.wait()


@jax.jit
def _checkbp_pallas(x):
    return pl.pallas_call(
        _checkbp_dma_kernel,
        out_shape=jax.ShapeDtypeStruct(x.shape, x.dtype),
        in_specs=[pl.BlockSpec(memory_space=pl.ANY)],    # raw HBM ref, no auto-DMA
        out_specs=pl.BlockSpec(memory_space=pl.ANY),     # raw HBM ref, no auto-DMA
        scratch_shapes=[pltpu.SemaphoreType.DMA],        # DMA-completion semaphore
    )(x)


# ------------------------------ public wrapper -------------------------------

def checkbp_forward(x, label="a", show=1, *, force_kernel=False):
    """Forward of CheckBP: returns `x` unchanged (identity).

    `label` / `show` only matter for the backward gradient check in the
    original module; they are accepted for API parity and ignored here (and
    deliberately kept out of any jit signature to avoid compile-cache misses).
    """
    del label, show  # backward-only arguments; no effect on forward
    nbytes = x.size * jnp.dtype(x.dtype).itemsize
    if not force_kernel and nbytes <= _FAST_PATH_MAX_BYTES:
        # Identity forward: nothing to do for tiny tensors.
        return x
    return _checkbp_pallas(x)


# ---------------------------------- main -------------------------------------

if __name__ == "__main__":
    key = jax.random.PRNGKey(0)
    k1, k2, k3 = jax.random.split(key, 3)

    # Shapes consistent with the module (CheckBP accepts any tensor).
    x = jax.random.normal(k1, (2, 4, 64, 64), jnp.float32)   # 128 KiB -> Pallas DMA path
    y = jax.random.normal(k2, (2, 4, 16, 16), jnp.float32)   # 8 KiB   -> fast path
    z = jax.random.normal(k3, (3, 5, 7), jnp.float32)        # odd tiny shape -> fast path

    out_x = jax.block_until_ready(checkbp_forward(x, label="a", show=1))
    out_y = jax.block_until_ready(checkbp_forward(y, label="b", show=1))
    out_z = jax.block_until_ready(checkbp_forward(z))
    # Also exercise the Pallas kernel on the module-consistent small shape.
    out_y_k = jax.block_until_ready(checkbp_forward(y, force_kernel=True))

    # Forward semantics of CheckBP: exact identity.
    for inp, out in ((x, out_x), (y, out_y), (z, out_z), (y, out_y_k)):
        assert out.shape == inp.shape and out.dtype == inp.dtype
        assert bool(jnp.array_equal(out, inp)), "CheckBP forward must be identity"
        assert bool(jnp.all(jnp.isfinite(out)))

    print("KERNEL_OK")
</pallas_src>

<mosaic_0001>
module attributes {stable_mosaic.version = 11 : i64} {
  func.func @_checkbp_dma_kernel(%arg0: memref<2x4x64x64xf32, #tpu.memory_space<any>>, %arg1: memref<2x4x64x64xf32, #tpu.memory_space<any>>, %arg2: memref<!tpu.dma_semaphore, #tpu.memory_space<semaphore_mem>>) attributes {dimension_semantics = [], scalar_prefetch = 0 : i64, scratch_operands = 1 : i64, tpu.core_type = #tpu.core_type<tc>} {
    tpu.enqueue_dma source(%arg0 : memref<2x4x64x64xf32, #tpu.memory_space<any>>) target(%arg1 : memref<2x4x64x64xf32, #tpu.memory_space<any>>) target_semaphore(%arg2 : memref<!tpu.dma_semaphore, #tpu.memory_space<semaphore_mem>>)
    tpu.wait_dma2 semaphore(%arg2 : memref<!tpu.dma_semaphore, #tpu.memory_space<semaphore_mem>>) src(%arg0 : memref<2x4x64x64xf32, #tpu.memory_space<any>>) dst(%arg1 : memref<2x4x64x64xf32, #tpu.memory_space<any>>)
    return
  }
}

</mosaic_0001>

<llo_original>
// kernel: _checkbp_pallas.1
$region0: #{_checkbp_pallas.1}
  #allocation0 [shape = 'u32[]', space=smem, size = 0x4, offset = 0x4, fixed_abs, tag = 'smem constant byte address 0x4 - core index']
  #allocation1 [shape = 'u32[144,128]{1,0:T(1,128)}', space=vmem, size = 0x12000, scoped, tag = 'internal scratch']
  #allocation2 [shape = 's32[1]{0}', space=sflag, size = 0x4, scoped, tag = 'scratch operand']
  #allocation3 [shape = 's32[]', space=sflag, size = 0x4, offset = 0, fixed_abs, tag = 'sflag constant byte address 0x0 - dummy sync flag']
  #allocation4 [shape = 'u32[0]{0}', space=smem, size = 0, offset = 0, fixed_abs, tag = 'smem constant byte address 0x0 - null']
  %s0 = inlined_call_operand.hbm [shape: f32[2,4,64,64], index: 0, kind: input, shape index: {}]
  %s1 = inlined_call_operand.hbm [shape: f32[2,4,64,64], index: 1, kind: output, shape index: {}]
  %s2 = sld [smem:[#allocation0]]
  $region2: #{_checkbp_pallas.1} parent=0
    _
  %s4 = ssub.s32 1, %s2
  %s5 = scalar_select 0, %s4, %s2
  %s7 = sshll.u32 1, 14
  %s8 = sxor.u32 4294967295, %s7
  %s11 = sshll.u32 3, 24
  %s12 = sxor.u32 4294967295, %s11
  %s13 = sand.u32 0, %s12
  %s15 = sor.u32 %s13, 0
  %18 = dma.general %s0, 8192, %s1, [#allocation2], [#allocation3], [#allocation4], %s15, 0
  %s19 = smul.u32 2, 4
  %s20 = smul.u32 %s19, 64
  %s21 = smul.u32 %s20, 1
  %s22 = sshll.u32 %s21, 4
  %23 = dma.done [#allocation2], %s22
  %24 = vsyncmov [#allocation2]
  %s25 = vpop.sfrf %24
  %p26 = scmp.eq.s32.totalorder %s25, 0
  %p27 = pneg %p26
  %29 = shalt.err (%p27)

</llo_original>
